<compile_context>
chip_gen: v7x
topology: tpu7x:2x2x1
jax: 0.10.0
libtpu: 0.0.40
codegen_flags: <defaults>
</compile_context>

<pallas_src>
import math
import numpy as np
import jax
import jax.numpy as jnp
from jax.experimental import pallas as pl
from jax.experimental.pallas import tpu as pltpu


def _layerscale_kernel(g_ref, x_ref, o_ref):
    # (TN, TDl) * (1, TDl) broadcast multiply; single store per element.
    o_ref[...] = x_ref[...] * g_ref[...]


def _tpu_budgets():
    """(per-block byte budget, physical VMEM bytes, assume-2-TensorCores)."""
    try:
        info = pltpu.get_tpu_info()
        vmem_cap = int(getattr(info, "vmem_capacity_bytes", 64 << 20))
    except Exception:  # non-TPU / interpret fallback: be conservative
        vmem_cap = 64 << 20
    if vmem_cap >= (100 << 20):          # v5e / v6e: 128 MiB physical VMEM, 1 TC
        return 6 << 20, vmem_cap, False
    # v7x-like: 64 MiB VMEM per TC, 2 TCs per chip
    return 4 << 20, vmem_cap, True


def layer_scale_pallas(x, gamma, *, inplace=False):
    orig_shape = x.shape
    D = int(orig_shape[-1])
    assert gamma.shape == (D,), (gamma.shape, D)
    if x.size == 0:  # empty leading dim: nothing for the kernel to do
        return x * gamma.astype(x.dtype)

    N = 1
    for d in orig_shape[:-1]:
        N *= int(d)

    gamma = gamma.astype(x.dtype)
    itemsize = jnp.dtype(x.dtype).itemsize
    sub = max(8, 32 // itemsize)               # packed sublane multiple per dtype
    block_budget, vmem_cap, two_core = _tpu_budgets()

    # ---- lane-density fold: make the last dim (close to) a multiple of 128 ---
    reps = 1
    if D % 128 != 0 and N > 1:
        k = 128 // math.gcd(D, 128)            # minimal k with (k * D) % 128 == 0
        if k > 1 and N % k == 0:
            reps = k
        else:
            # best divisor r of N (capped) that maximizes lane utilization
            best_r = 1
            best_util = D / (pl.cdiv(D, 128) * 128.0)
            for r in range(2, min(N, 64) + 1):
                if N % r != 0 or r * D * itemsize > block_budget:
                    continue
                dl = r * D
                util = dl / (pl.cdiv(dl, 128) * 128.0)
                if util > best_util + 1e-9:
                    best_r, best_util = r, util
            reps = best_r
    Nl, Dl = N // reps, D * reps
    x2 = x.reshape(Nl, Dl)
    g2 = (jnp.tile(gamma, reps) if reps > 1 else gamma).reshape(1, Dl)

    # ---- tile selection (row tile tn, lane tile tdl) -------------------------
    row_bytes = Dl * itemsize
    tdl = Dl
    if row_bytes > block_budget and Dl % 128 == 0:
        # Single row is wider than the budget: add a lane grid axis.
        tn = sub if Nl > sub else Nl
        lanes = max(1, (block_budget // (max(tn, 1) * itemsize)) // 128) * 128
        tdl = min(Dl, lanes)
    else:
        budget_rows = max(1, block_budget // row_bytes)
        if Nl <= sub:
            tn = Nl                             # full-extent block (exempt from /8 rule)
        elif Nl <= budget_rows:
            if two_core and Nl >= 2 * sub:
                # guarantee >= 2 grid steps so both TensorCores get a slab
                half = -(-Nl // 2)
                tn = -(-half // sub) * sub
            else:
                tn = Nl                         # one big full-extent slab (v5e/v6e)
        else:
            tn = min(Nl, budget_rows)
            tn = max(sub, (tn // sub) * sub)
    grid = (pl.cdiv(Nl, tn), pl.cdiv(Dl, tdl))

    # ---- scoped-VMEM limit derived from the actual blocks --------------------
    block_bytes = tn * tdl * itemsize
    vmem_need = 4 * block_bytes + 4 * tdl * itemsize + (2 << 20)  # dbl-buffered in+out
    vmem_limit = int(min(max(vmem_need, 16 << 20), vmem_cap - (4 << 20)))

    cost = pl.CostEstimate(
        flops=Nl * Dl,
        transcendentals=0,
        bytes_accessed=2 * Nl * Dl * itemsize + Dl * itemsize,
    )

    out = pl.pallas_call(
        _layerscale_kernel,
        out_shape=jax.ShapeDtypeStruct((Nl, Dl), x.dtype),
        grid=grid,
        in_specs=[
            pl.BlockSpec((1, tdl), lambda i, j: (0, j)),    # gamma (tiny, resident)
            pl.BlockSpec((tn, tdl), lambda i, j: (i, j)),   # x slab
        ],
        out_specs=pl.BlockSpec((tn, tdl), lambda i, j: (i, j)),
        compiler_params=pltpu.CompilerParams(
            dimension_semantics=("parallel", "parallel"),
            vmem_limit_bytes=vmem_limit),
        cost_estimate=cost,
        input_output_aliases=({1: 0} if inplace else {}),
    )(g2, x2)
    return out.reshape(orig_shape)


class LayerScalePallas:
    """Pallas equivalent of open_clip's LayerScale (forward only)."""

    def __init__(self, dim, init_values=1e-5, inplace=False):
        # inplace only changes whether torch mutates x in place; the forward
        # value is identical. We map it to input/output buffer aliasing.
        self.inplace = inplace
        self.gamma = init_values * jnp.ones((dim,), dtype=jnp.float32)

    def __call__(self, x):
        return layer_scale_pallas(x, self.gamma, inplace=self.inplace)


if __name__ == "__main__":
    key = jax.random.PRNGKey(0)
    k1, k2, k3 = jax.random.split(key, 3)

    # shapes consistent with LayerScale usage: (batch, seq, hidden)
    B, S, Dh = 2, 8, 32
    x = jax.random.normal(k1, (B, S, Dh), dtype=jnp.float32)

    mod = LayerScalePallas(dim=Dh, init_values=1e-5)
    mod.gamma = jax.random.normal(k2, (Dh,), dtype=jnp.float32)  # non-trivial gamma

    out = jax.block_until_ready(mod(x))
    ref = np.asarray(x) * np.asarray(mod.gamma)[None, None, :]
    assert out.shape == x.shape, out.shape
    np.testing.assert_allclose(np.asarray(out), ref, rtol=1e-6, atol=1e-6)

    # default-initialized gamma (init_values * ones), 4-D input
    mod2 = LayerScalePallas(dim=Dh)
    x4 = jax.random.normal(k3, (2, 4, 3, Dh), dtype=jnp.float32)
    out2 = jax.block_until_ready(mod2(x4))
    ref2 = np.asarray(x4) * np.asarray(mod2.gamma)
    np.testing.assert_allclose(np.asarray(out2), ref2, rtol=1e-6, atol=1e-9)

    # ragged / unfoldable-D path: D=48, N=15 (folds by r=5 -> 94% lane use)
    D3 = 48
    x3 = jax.random.normal(k1, (3, 5, D3), dtype=jnp.float32)
    g3 = jax.random.normal(k2, (D3,), dtype=jnp.float32)
    out3 = jax.block_until_ready(layer_scale_pallas(x3, g3))
    np.testing.assert_allclose(
        np.asarray(out3), np.asarray(x3) * np.asarray(g3), rtol=1e-6, atol=1e-6)

    # bf16 input (16-row sublane rounding) + inplace aliasing path
    xb = jax.random.normal(k3, (4, 24, 64), dtype=jnp.bfloat16)
    gb = jax.random.normal(k2, (64,), dtype=jnp.float32)
    outb = jax.block_until_ready(layer_scale_pallas(xb, gb, inplace=True))
    refb = (np.asarray(xb, np.float32)
            * np.asarray(gb.astype(jnp.bfloat16), np.float32))
    np.testing.assert_allclose(np.asarray(outb, np.float32), refb,
                               rtol=2e-2, atol=2e-2)

    print("KERNEL_OK")
</pallas_src>

<mosaic_0001>
module attributes {stable_mosaic.version = 11 : i64} {
  func.func @_layerscale_kernel(%arg0: i32, %arg1: i32, %arg2: memref<1x128xf32, #tpu.memory_space<vmem>>, %arg3: memref<4x128xf32, #tpu.memory_space<vmem>>, %arg4: memref<4x128xf32, #tpu.memory_space<vmem>>) attributes {dimension_semantics = [#tpu.dimension_semantics<parallel>, #tpu.dimension_semantics<parallel>], iteration_bounds = array<i64: 1, 1>, scalar_prefetch = 0 : i64, scratch_operands = 0 : i64, tpu.core_type = #tpu.core_type<tc>, window_params = [{transform_indices = @transform_0, window_bounds = array<i64: 1, 128>}, {transform_indices = @transform_1, window_bounds = array<i64: 4, 128>}, {transform_indices = @transform_2, window_bounds = array<i64: 4, 128>}]} {
    %c0 = arith.constant 0 : index
    %c0_0 = arith.constant 0 : index
    %0 = vector.load %arg3[%c0, %c0_0] : memref<4x128xf32, #tpu.memory_space<vmem>>, vector<4x128xf32>
    %c0_1 = arith.constant 0 : index
    %c0_2 = arith.constant 0 : index
    %1 = vector.load %arg2[%c0_1, %c0_2] : memref<1x128xf32, #tpu.memory_space<vmem>>, vector<1x128xf32>
    %2 = vector.broadcast %1 : vector<1x128xf32> to vector<4x128xf32>
    %3 = arith.mulf %0, %2 : vector<4x128xf32>
    %c0_3 = arith.constant 0 : index
    %c0_4 = arith.constant 0 : index
    %4 = vector.load %arg4[%c0_3, %c0_4] : memref<4x128xf32, #tpu.memory_space<vmem>>, vector<4x128xf32>
    tpu.vector_store %arg4[%c0_3, %c0_4], %3 {strides = array<i32>} : memref<4x128xf32, #tpu.memory_space<vmem>>, vector<4x128xf32>,
    return
  }
  func.func @transform_0(%arg0: i32, %arg1: i32) -> (i32, i32) {
    %c0_i32 = arith.constant 0 : i32
    %c0_i32_0 = arith.constant 0 : i32
    return %c0_i32, %arg1 : i32, i32
  }
  func.func @transform_1(%arg0: i32, %arg1: i32) -> (i32, i32) {
    %c0_i32 = arith.constant 0 : i32
    return %arg0, %arg1 : i32, i32
  }
  func.func @transform_2(%arg0: i32, %arg1: i32) -> (i32, i32) {
    %c0_i32 = arith.constant 0 : i32
    return %arg0, %arg1 : i32, i32
  }
}

</mosaic_0001>

<llo_original>
// kernel: tpu_custom_call.1
$region0: #{tpu_custom_call.1}
  #allocation0 [shape = 'u32[]', space=smem, size = 0x4, offset = 0x4, fixed_abs, tag = 'smem constant byte address 0x4 - core index']
  #allocation1 [shape = 'u32[144,128]{1,0:T(1,128)}', space=vmem, size = 0x12000, scoped, tag = 'internal scratch']
  %s0 = inlined_call_operand.hbm [shape: f32[1,128], index: 0, kind: input, shape index: {}]
  %s1 = inlined_call_operand.hbm [shape: f32[4,128], index: 1, kind: input, shape index: {}]
  %s2 = inlined_call_operand.hbm [shape: f32[4,128], index: 2, kind: output, shape index: {}]
  %s3 = sld [smem:[#allocation0]]
  $region26: #{tpu_custom_call.1} parent=0
    _
  %s5 = ssub.s32 1, %s3
  %s6 = scalar_select 0, %s5, %s3
  $region1: #{tpu_custom_call.1} parent=0
    #allocation2 [shape = 'u8[512]{0}', space=vmem, size = 0x400, scoped, tag = 'input window, operand 0, single buffered']
    #allocation3 [shape = 's32[1]{0}', space=sflag, size = 0x4, scoped, tag = 'scoped memory for tpu_custom_call.1']
    #allocation4 [shape = 's32[1]{0}', space=sflag, size = 0x4, scoped, tag = 'scoped memory for tpu_custom_call.1']
    #allocation5 [shape = 'u8[2048]{0}', space=vmem, size = 0x800, scoped, tag = 'input window, operand 1, single buffered']
    #allocation6 [shape = 's32[1]{0}', space=sflag, size = 0x4, scoped, tag = 'scoped memory for tpu_custom_call.1']
    #allocation7 [shape = 'u8[2048]{0}', space=vmem, size = 0x800, scoped, tag = 'output window, operand 0, single buffered']
    %7 = vsyncpa [#allocation3], 0
    %8 = vsyncpa [#allocation6], 0
    %9 = vsyncpa [#allocation4], 0
    // Predicated region
    $region2: #{tpu_custom_call.1} parent=1 // pred_check
      _
    $region3: #{tpu_custom_call.1} parent=1 // pred_check_branch
      %11 = sbr.rel (0) target = $region5
    $region4: #{tpu_custom_call.1} parent=1 // pred_region
      %s13 = ssub.s32 16, 16
      %14 = vsyncadd [#allocation3], %s13
      %s16 = sshll.u32 [#allocation2], 4
      %s17 = int_to_ptr.vmem [resolvable:$true] %s16
      %19 = dma.hbm_to_vmem [thread:$0]  %s0, 16, %s17, [#allocation3]
    $region5: #{tpu_custom_call.1} parent=1 // pred_fallthru
      _
    // Predicated region
    $region6: #{tpu_custom_call.1} parent=1 // pred_check
      _
    $region7: #{tpu_custom_call.1} parent=1 // pred_check_branch
      %21 = sbr.rel (0) target = $region9
    $region8: #{tpu_custom_call.1} parent=1 // pred_region
      %s23 = ssub.s32 64, 64
      %24 = vsyncadd [#allocation6], %s23
      %s26 = sshll.u32 [#allocation5], 4
      %s27 = int_to_ptr.vmem [resolvable:$true] %s26
      %29 = dma.hbm_to_vmem [thread:$0]  %s1, 64, %s27, [#allocation6]
    $region9: #{tpu_custom_call.1} parent=1 // pred_fallthru
      _
    // Predicated region
    $region10: #{tpu_custom_call.1} parent=1 // pred_check
      _
    $region11: #{tpu_custom_call.1} parent=1 // pred_check_branch
      %31 = sbr.rel (0) target = $region13
    $region12: #{tpu_custom_call.1} parent=1 // pred_region
      %32 = dma.done [#allocation3], 16
    $region13: #{tpu_custom_call.1} parent=1 // pred_fallthru
      _
    // Predicated region
    $region14: #{tpu_custom_call.1} parent=1 // pred_check
      _
    $region15: #{tpu_custom_call.1} parent=1 // pred_check_branch
      %34 = sbr.rel (0) target = $region17
    $region16: #{tpu_custom_call.1} parent=1 // pred_region
      %35 = dma.done [#allocation6], 64
    $region17: #{tpu_custom_call.1} parent=1 // pred_fallthru
      _
    %v36 = vld [vmem:[#allocation5] sm:$0xf]
    %v37 = vld [vmem:[#allocation2] sm:$0x1]
    %v39 = vlaneseq
    %v40 = vshrl.u32 %v39, 7
    %v41 = vsub.s32 0, %v40
    %v42 = vrot.slane %v37, %v41
    %v44 = vmul.f32 %v36, %v42
    %45 = vst [vmem:[#allocation7] sm:$0xf] %v44
    // Predicated region
    $region18: #{tpu_custom_call.1} parent=1 // pred_check
      _
    $region19: #{tpu_custom_call.1} parent=1 // pred_check_branch
      %47 = sbr.rel (0) target = $region21
    $region20: #{tpu_custom_call.1} parent=1 // pred_region
      %s49 = ssub.s32 64, 64
      %50 = vsyncadd [#allocation4], %s49
      %s52 = sshll.u32 [#allocation7], 4
      %s53 = int_to_ptr.vmem [resolvable:$true] %s52
      %55 = dma.vmem_to_hbm [thread:$0]  %s53, 64, %s2, [#allocation4]
    $region21: #{tpu_custom_call.1} parent=1 // pred_fallthru
      _
    // Predicated region
    $region22: #{tpu_custom_call.1} parent=1 // pred_check
      _
    $region23: #{tpu_custom_call.1} parent=1 // pred_check_branch
      %57 = sbr.rel (0) target = $region25
    $region24: #{tpu_custom_call.1} parent=1 // pred_region
      %58 = dma.done [#allocation4], 64
    $region25: #{tpu_custom_call.1} parent=1 // pred_fallthru
      _
    %59 = vsyncpa [#allocation3], 1
    %60 = vsyncpa [#allocation6], 1
    %61 = vsyncpa [#allocation4], 1

</llo_original>
